<compile_context>
chip_gen: v6e
topology: v6e:2x2x1
jax: 0.10.0
libtpu: 0.0.40
codegen_flags: <defaults>
</compile_context>

<pallas_src>
import jax
import jax.numpy as jnp
from jax.experimental import pallas as pl
from jax.experimental.pallas import tpu as pltpu


def mlp_kernel(x_ref, w1_ref, b1_ref, w2_ref, b2_ref, o_ref):
    # Cast x on the VPU right next to the MXU (free slot) instead of a
    # separate wrapper-side XLA pass over x in HBM.
    x = x_ref[...].astype(w1_ref.dtype)
    # First matmul on the MXU (bf16 operands, f32 accumulate).
    h = jnp.dot(x, w1_ref[...], preferred_element_type=jnp.float32)
    # Bias + ReLU in f32 on the VPU.
    h = jnp.maximum(h + b1_ref[...], 0.0)
    # Second matmul; bias add in f32; store unpadded output columns.
    out = jnp.dot(h.astype(w2_ref.dtype), w2_ref[...],
                  preferred_element_type=jnp.float32)
    o_ref[...] = (out + b2_ref[...]).astype(o_ref.dtype)


def _round_up(x, m):
    return (x + m - 1) // m * m


def _choose_tile_m(m8, max_tile=512):
    """Pick a tile over M: multiple of 8, prefer an exact divisor of m8 (so no
    M padding / post-slice copy), and >= 2 grid steps when possible (v7x)."""
    cap = min(max_tile, m8)
    if m8 >= 16:
        cap = min(cap, m8 // 2)     # >= 2 grid steps -> both v7x TCs run
    cap = max(8, cap - cap % 8)
    best = 8
    for t in range(8, cap + 1, 8):
        if m8 % t == 0:
            best = t
    # Only accept a tiny exact tile for small problems; otherwise pad M.
    if best < 128 and m8 > 4096:
        return cap, _round_up(m8, cap)
    return best, m8


def prepare_params(w1, b1, w2, b2, *, compute_dtype=jnp.bfloat16):
    """One-time weight preprocessing (pad hidden dim to 128 lanes + cast).

    Padded hidden columns contribute relu(0) = 0 through zero rows of w2, so
    the math on the real outputs is unchanged.  Do this once, not per call.
    """
    S = w1.shape[1]
    S_pad = _round_up(S, 128)
    w1p = jnp.pad(w1, ((0, 0), (0, S_pad - S))).astype(compute_dtype)
    b1p = jnp.pad(b1, (0, S_pad - S)).astype(jnp.float32).reshape(1, S_pad)
    w2p = jnp.pad(w2, ((0, S_pad - S), (0, 0))).astype(compute_dtype)
    b2p = b2.astype(jnp.float32).reshape(1, -1)
    return w1p, b1p, w2p, b2p


def simple_model_forward(x, w1p, b1p, w2p, b2p, *, tile_m=512):
    """x: (B, T, input_size) f32; params from prepare_params.
    Returns (B, T, num_outputs) in x.dtype."""
    B, T, F = x.shape
    S_pad = w1p.shape[1]
    O = w2p.shape[1]
    M = B * T

    M8 = _round_up(M, 8)
    tile_m, M_pad = _choose_tile_m(M8, max_tile=tile_m)

    x2d = x.reshape(M, F)                       # same as torch .view(-1, F)
    if M_pad != M:
        x2d = jnp.pad(x2d, ((0, M_pad - M), (0, 0)))

    grid = (M_pad // tile_m,)
    xbytes = jnp.dtype(x.dtype).itemsize
    wbytes = jnp.dtype(w1p.dtype).itemsize
    cost = pl.CostEstimate(
        flops=2 * M_pad * (F * S_pad + S_pad * O),
        transcendentals=0,
        bytes_accessed=(M_pad * F * xbytes + M_pad * O * xbytes
                        + w1p.size * wbytes + w2p.size * wbytes
                        + b1p.size * 4 + b2p.size * 4),
    )

    out2d = pl.pallas_call(
        mlp_kernel,
        out_shape=jax.ShapeDtypeStruct((M_pad, O), x.dtype),
        grid=grid,
        in_specs=[
            pl.BlockSpec((tile_m, F), lambda i: (i, 0)),     # x: tiled over M
            pl.BlockSpec((F, S_pad), lambda i: (0, 0)),      # w1: VMEM-resident
            pl.BlockSpec((1, S_pad), lambda i: (0, 0)),      # b1: resident
            pl.BlockSpec((S_pad, O), lambda i: (0, 0)),      # w2: resident
            pl.BlockSpec((1, O), lambda i: (0, 0)),          # b2: resident
        ],
        # Last dim of the out block equals the full array dim (O), so no
        # padded columns are ever written back to HBM.
        out_specs=pl.BlockSpec((tile_m, O), lambda i: (i, 0)),
        compiler_params=pltpu.CompilerParams(
            dimension_semantics=("parallel",),
            vmem_limit_bytes=32 << 20),
        cost_estimate=cost,
    )(x2d, w1p, b1p, w2p, b2p)

    if M_pad != M:
        out2d = out2d[:M]
    return out2d.reshape(B, T, O)


def init_params(key, input_size, state_size, num_outputs, dtype=jnp.float32):
    """Deterministic init mimicking nn.Linear's uniform(-1/sqrt(fan_in), ...)."""
    k1, k2, k3, k4 = jax.random.split(key, 4)
    bound1 = 1.0 / (input_size ** 0.5)
    bound2 = 1.0 / (state_size ** 0.5)
    # stored as (in_features, out_features) == W.T of PyTorch's nn.Linear weight
    w1 = jax.random.uniform(k1, (input_size, state_size), dtype, -bound1, bound1)
    b1 = jax.random.uniform(k2, (state_size,), dtype, -bound1, bound1)
    w2 = jax.random.uniform(k3, (state_size, num_outputs), dtype, -bound2, bound2)
    b2 = jax.random.uniform(k4, (num_outputs,), dtype, -bound2, bound2)
    return w1, b1, w2, b2


if __name__ == "__main__":
    # Shapes implied by the forward: x is (batch, time_steps, input_size).
    batch, time_steps, input_size = 2, 8, 16
    state_size, num_outputs = 32, 8

    key = jax.random.PRNGKey(0)
    kx, kp = jax.random.split(key)
    x = jax.random.normal(kx, (batch, time_steps, input_size), jnp.float32)
    w1, b1, w2, b2 = init_params(kp, input_size, state_size, num_outputs)

    # Weight preprocessing hoisted out of the per-call path.
    params = prepare_params(w1, b1, w2, b2)
    fwd = jax.jit(simple_model_forward)

    out = fwd(x, *params)
    jax.block_until_ready(out)
    assert out.shape == (batch, time_steps, num_outputs)

    # Reference 1: mirror the kernel's bf16-operand / f32-accumulate math.
    xb = x.reshape(-1, input_size).astype(jnp.bfloat16)
    h = jnp.dot(xb, w1.astype(jnp.bfloat16),
                preferred_element_type=jnp.float32) + b1
    h = jnp.maximum(h, 0.0)
    ref_bf16 = jnp.dot(h.astype(jnp.bfloat16), w2.astype(jnp.bfloat16),
                       preferred_element_type=jnp.float32) + b2
    ref_bf16 = ref_bf16.astype(x.dtype).reshape(batch, time_steps, num_outputs)
    assert jnp.allclose(out, ref_bf16, atol=1e-3, rtol=1e-3)

    # Reference 2: full-f32 math of the PyTorch module (loose tolerance since
    # the kernel intentionally uses bf16 MXU operands).
    ref_f32 = jnp.maximum(x.reshape(-1, input_size) @ w1 + b1, 0.0) @ w2 + b2
    ref_f32 = ref_f32.reshape(batch, time_steps, num_outputs)
    assert jnp.allclose(out, ref_f32, atol=5e-2, rtol=5e-2)

    print("KERNEL_OK")
</pallas_src>

<mosaic_0001>
module attributes {stable_mosaic.version = 11 : i64} {
  func.func @mlp_kernel(%arg0: i32, %arg1: memref<8x16xf32, #tpu.memory_space<vmem>>, %arg2: memref<16x128xbf16, #tpu.memory_space<vmem>>, %arg3: memref<1x128xf32, #tpu.memory_space<vmem>>, %arg4: memref<128x8xbf16, #tpu.memory_space<vmem>>, %arg5: memref<1x8xf32, #tpu.memory_space<vmem>>, %arg6: memref<8x8xf32, #tpu.memory_space<vmem>>) attributes {dimension_semantics = [#tpu.dimension_semantics<parallel>], iteration_bounds = array<i64: 2>, scalar_prefetch = 0 : i64, scratch_operands = 0 : i64, tpu.core_type = #tpu.core_type<tc>, window_params = [{transform_indices = @transform_0, window_bounds = array<i64: 8, 16>}, {pipeline_mode = #tpu.pipeline_mode<synchronous>, transform_indices = @transform_1, window_bounds = array<i64: 16, 128>}, {pipeline_mode = #tpu.pipeline_mode<synchronous>, transform_indices = @transform_2, window_bounds = array<i64: 1, 128>}, {pipeline_mode = #tpu.pipeline_mode<synchronous>, transform_indices = @transform_3, window_bounds = array<i64: 128, 8>}, {pipeline_mode = #tpu.pipeline_mode<synchronous>, transform_indices = @transform_4, window_bounds = array<i64: 1, 8>}, {transform_indices = @transform_5, window_bounds = array<i64: 8, 8>}]} {
    %c0 = arith.constant 0 : index
    %c0_0 = arith.constant 0 : index
    %0 = vector.load %arg1[%c0, %c0_0] : memref<8x16xf32, #tpu.memory_space<vmem>>, vector<8x16xf32>
    %1 = arith.truncf %0 : vector<8x16xf32> to vector<8x16xbf16>
    %c0_1 = arith.constant 0 : index
    %c0_2 = arith.constant 0 : index
    %2 = vector.load %arg2[%c0_1, %c0_2] : memref<16x128xbf16, #tpu.memory_space<vmem>>, vector<16x128xbf16>
    %cst = arith.constant dense<0.000000e+00> : vector<8x128xf32>
    %3 = tpu.matmul %1, %2, %cst {dimension_numbers = #tpu.dot_dimension_numbers<[1], [0], [0], [1], [0, 0, 1, 1], [], []>} : vector<8x16xbf16>, vector<16x128xbf16>, vector<8x128xf32> -> vector<8x128xf32>
    %c0_3 = arith.constant 0 : index
    %c0_4 = arith.constant 0 : index
    %4 = vector.load %arg3[%c0_3, %c0_4] : memref<1x128xf32, #tpu.memory_space<vmem>>, vector<1x128xf32>
    %5 = vector.broadcast %4 : vector<1x128xf32> to vector<8x128xf32>
    %6 = arith.addf %3, %5 : vector<8x128xf32>
    %cst_5 = arith.constant 0.000000e+00 : f32
    %7 = vector.broadcast %cst_5 : f32 to vector<8x128xf32>
    %8 = arith.maximumf %6, %7 : vector<8x128xf32>
    %9 = arith.truncf %8 : vector<8x128xf32> to vector<8x128xbf16>
    %c0_6 = arith.constant 0 : index
    %c0_7 = arith.constant 0 : index
    %10 = vector.load %arg4[%c0_6, %c0_7] : memref<128x8xbf16, #tpu.memory_space<vmem>>, vector<128x8xbf16>
    %cst_8 = arith.constant dense<0.000000e+00> : vector<8x8xf32>
    %11 = tpu.matmul %9, %10, %cst_8 {dimension_numbers = #tpu.dot_dimension_numbers<[1], [0], [0], [1], [0, 0, 1, 1], [], []>} : vector<8x128xbf16>, vector<128x8xbf16>, vector<8x8xf32> -> vector<8x8xf32>
    %c0_9 = arith.constant 0 : index
    %c0_10 = arith.constant 0 : index
    %12 = vector.load %arg5[%c0_9, %c0_10] : memref<1x8xf32, #tpu.memory_space<vmem>>, vector<1x8xf32>
    %13 = vector.broadcast %12 : vector<1x8xf32> to vector<8x8xf32>
    %14 = arith.addf %11, %13 : vector<8x8xf32>
    %c0_11 = arith.constant 0 : index
    %c0_12 = arith.constant 0 : index
    %15 = vector.load %arg6[%c0_11, %c0_12] : memref<8x8xf32, #tpu.memory_space<vmem>>, vector<8x8xf32>
    tpu.vector_store %arg6[%c0_11, %c0_12], %14 {strides = array<i32>} : memref<8x8xf32, #tpu.memory_space<vmem>>, vector<8x8xf32>,
    return
  }
  func.func @transform_0(%arg0: i32) -> (i32, i32) {
    %c0_i32 = arith.constant 0 : i32
    %c0_i32_0 = arith.constant 0 : i32
    return %arg0, %c0_i32 : i32, i32
  }
  func.func @transform_1(%arg0: i32) -> (i32, i32) {
    %c0_i32 = arith.constant 0 : i32
    %c0_i32_0 = arith.constant 0 : i32
    %c0_i32_1 = arith.constant 0 : i32
    return %c0_i32, %c0_i32_0 : i32, i32
  }
  func.func @transform_2(%arg0: i32) -> (i32, i32) {
    %c0_i32 = arith.constant 0 : i32
    %c0_i32_0 = arith.constant 0 : i32
    %c0_i32_1 = arith.constant 0 : i32
    return %c0_i32, %c0_i32_0 : i32, i32
  }
  func.func @transform_3(%arg0: i32) -> (i32, i32) {
    %c0_i32 = arith.constant 0 : i32
    %c0_i32_0 = arith.constant 0 : i32
    %c0_i32_1 = arith.constant 0 : i32
    return %c0_i32, %c0_i32_0 : i32, i32
  }
  func.func @transform_4(%arg0: i32) -> (i32, i32) {
    %c0_i32 = arith.constant 0 : i32
    %c0_i32_0 = arith.constant 0 : i32
    %c0_i32_1 = arith.constant 0 : i32
    return %c0_i32, %c0_i32_0 : i32, i32
  }
  func.func @transform_5(%arg0: i32) -> (i32, i32) {
    %c0_i32 = arith.constant 0 : i32
    %c0_i32_0 = arith.constant 0 : i32
    return %arg0, %c0_i32 : i32, i32
  }
}

</mosaic_0001>

<llo_original>
// kernel: simple_model_forward.1
$region0: #{simple_model_forward.1}
  #allocation0 [shape = 'u32[]', space=smem, size = 0x4, offset = 0x4, fixed_abs, tag = 'smem constant byte address 0x4 - core index']
  #allocation1 [shape = 'u32[144,128]{1,0:T(1,128)}', space=vmem, size = 0x12000, scoped, tag = 'internal scratch']
  %s0 = inlined_call_operand.vmem [shape: f32[16,16], index: 0, kind: input, shape index: {}]
  %s1 = inlined_call_operand.vmem [shape: bf16[16,128], index: 1, kind: input, shape index: {}]
  %s2 = inlined_call_operand.vmem [shape: f32[1,128], index: 2, kind: input, shape index: {}]
  %s3 = inlined_call_operand.vmem [shape: bf16[128,8], index: 3, kind: input, shape index: {}]
  %s4 = inlined_call_operand.vmem [shape: f32[1,8], index: 4, kind: input, shape index: {}]
  %s5 = inlined_call_operand.hbm [shape: f32[16,8], index: 5, kind: output, shape index: {}]
  %s6 = sld [smem:[#allocation0]]
  $region53: #{simple_model_forward.1} parent=0
    _
  %s8 = ssub.s32 1, %s6
  %s9 = scalar_select 0, %s8, %s6
  $region1: #{simple_model_forward.1} parent=0
    #allocation2 [shape = 'u8[8192]{0}', space=vmem, size = 0x2000, scoped, tag = 'output window, operand 0']
    #allocation3 [shape = 's32[2]{0}', space=sflag, size = 0x8, scoped, tag = 'scoped memory for simple_model_forward.1']
    %10 = vsyncpa [#allocation3], 0
    %s11 = scalar_lea.sflag [#allocation3], 1
    %12 = vsyncpa %s11, 0
    loop: start=0, step=1, limit=4
    $region2: #{simple_model_forward.1} parent=1 // loop_pre_header
      _
    $region3: #{simple_model_forward.1} parent=1 // loop_header
      %s14 = sphi 0, %s18
      %p15 = scmp.ge.s32.totalorder %s14, 4
      %s24 = sphi 0, %s26
      %s27 = sphi 0, %s24
      %s28 = sphi 0, %s27
      %s44 = sphi 0, %s28
      %s48 = sphi 0, %s48
      %s50 = sphi 0, %s48
      %s51 = sphi 0, %s50
      %s65 = sphi 0, %s51
      %s69 = sphi 0, %s69
      %s71 = sphi 0, %s69
      %s72 = sphi 0, %s71
      %s86 = sphi 0, %s72
      %s90 = sphi 0, %s90
      %s92 = sphi 0, %s90
      %s93 = sphi 0, %s92
      %s107 = sphi 0, %s93
      %s111 = sphi 0, %s111
      %s113 = sphi 0, %s111
      %s114 = sphi 0, %s113
      %s128 = sphi 0, %s114
      %s134 = sphi 0, %s136
      %s137 = sphi 0, %s134
      %s138 = sphi 0, %s137
      %s154 = sphi 0, %s138
    $region4: #{simple_model_forward.1} parent=1 // loop_header_branch
      %17 = sbr.rel (%p15) target = $region8
    $region5: #{simple_model_forward.1} parent=1 // loop_body
      %s19 = ssub.s32 %s14, 1
      %s20 = ssub.s32 %s14, 2
      %s21 = sadd.s32 %s14, 1
      %s22 = ssub.s32 %s14, %s21
      %p23 = scmp.eq.s32.totalorder %s22, 0
      %s25 = sadd.s32 %s24, 1
      %s26 = scalar_select %p23, %s24, %s25
      %p29 = pneg %p23
      %p30 = scmp.eq.s32.totalorder %s14, 1
      %p31 = por %p29, %p30
      %p32 = scmp.ne.s32.totalorder %s24, %s27
      %p33 = scmp.eq.s32.totalorder %s14, 0
      %p34 = por %p32, %p33
      %p35 = scmp.ne.s32.totalorder %s24, %s27
      %p36 = scmp.eq.s32.totalorder %s19, 1
      %p37 = por %p35, %p36
      %p38 = scmp.ne.s32.totalorder %s27, %s28
      %p39 = scmp.eq.s32.totalorder %s19, 0
      %p40 = por %p38, %p39
      %p41 = scmp.ne.s32.totalorder %s27, %s28
      %p42 = scmp.eq.s32.totalorder %s20, 1
      %p43 = por %p41, %p42
      %p45 = scmp.ne.s32.totalorder %s28, %s44
      %p46 = scmp.eq.s32.totalorder %s20, 0
      %p47 = por %p45, %p46
      %s49 = sadd.s32 %s48, 1
      %p52 = scmp.eq.s32.totalorder %s14, 1
      %p53 = scmp.ne.s32.totalorder %s48, %s50
      %p54 = scmp.eq.s32.totalorder %s14, 0
      %p55 = por %p53, %p54
      %p56 = scmp.ne.s32.totalorder %s48, %s50
      %p57 = scmp.eq.s32.totalorder %s19, 1
      %p58 = por %p56, %p57
      %p59 = scmp.ne.s32.totalorder %s50, %s51
      %p60 = scmp.eq.s32.totalorder %s19, 0
      %p61 = por %p59, %p60
      %p62 = scmp.ne.s32.totalorder %s50, %s51
      %p63 = scmp.eq.s32.totalorder %s20, 1
      %p64 = por %p62, %p63
      %p66 = scmp.ne.s32.totalorder %s51, %s65
      %p67 = scmp.eq.s32.totalorder %s20, 0
      %p68 = por %p66, %p67
      %s70 = sadd.s32 %s69, 1
      %p73 = scmp.eq.s32.totalorder %s14, 1
      %p74 = scmp.ne.s32.totalorder %s69, %s71
      %p75 = scmp.eq.s32.totalorder %s14, 0
      %p76 = por %p74, %p75
      %p77 = scmp.ne.s32.totalorder %s69, %s71
      %p78 = scmp.eq.s32.totalorder %s19, 1
      %p79 = por %p77, %p78
      %p80 = scmp.ne.s32.totalorder %s71, %s72
      %p81 = scmp.eq.s32.totalorder %s19, 0
      %p82 = por %p80, %p81
      %p83 = scmp.ne.s32.totalorder %s71, %s72
      %p84 = scmp.eq.s32.totalorder %s20, 1
      %p85 = por %p83, %p84
      %p87 = scmp.ne.s32.totalorder %s72, %s86
      %p88 = scmp.eq.s32.totalorder %s20, 0
      %p89 = por %p87, %p88
      %s91 = sadd.s32 %s90, 1
      %p94 = scmp.eq.s32.totalorder %s14, 1
      %p95 = scmp.ne.s32.totalorder %s90, %s92
      %p96 = scmp.eq.s32.totalorder %s14, 0
      %p97 = por %p95, %p96
      %p98 = scmp.ne.s32.totalorder %s90, %s92
      %p99 = scmp.eq.s32.totalorder %s19, 1
      %p100 = por %p98, %p99
      %p101 = scmp.ne.s32.totalorder %s92, %s93
      %p102 = scmp.eq.s32.totalorder %s19, 0
      %p103 = por %p101, %p102
      %p104 = scmp.ne.s32.totalorder %s92, %s93
      %p105 = scmp.eq.s32.totalorder %s20, 1
      %p106 = por %p104, %p105
      %p108 = scmp.ne.s32.totalorder %s93, %s107
      %p109 = scmp.eq.s32.totalorder %s20, 0
      %p110 = por %p108, %p109
      %s112 = sadd.s32 %s111, 1
      %p115 = scmp.eq.s32.totalorder %s14, 1
      %p116 = scmp.ne.s32.totalorder %s111, %s113
      %p117 = scmp.eq.s32.totalorder %s14, 0
      %p118 = por %p116, %p117
      %p119 = scmp.ne.s32.totalorder %s111, %s113
      %p120 = scmp.eq.s32.totalorder %s19, 1
      %p121 = por %p119, %p120
      %p122 = scmp.ne.s32.totalorder %s113, %s114
      %p123 = scmp.eq.s32.totalorder %s19, 0
      %p124 = por %p122, %p123
      %p125 = scmp.ne.s32.totalorder %s113, %s114
      %p126 = scmp.eq.s32.totalorder %s20, 1
      %p127 = por %p125, %p126
      %p129 = scmp.ne.s32.totalorder %s114, %s128
      %p130 = scmp.eq.s32.totalorder %s20, 0
      %p131 = por %p129, %p130
      %s132 = ssub.s32 %s14, %s21
      %p133 = scmp.eq.s32.totalorder %s132, 0
      %s135 = sadd.s32 %s134, 1
      %s136 = scalar_select %p133, %s134, %s135
      %p139 = pneg %p133
      %p140 = scmp.eq.s32.totalorder %s14, 1
      %p141 = por %p139, %p140
      %p142 = scmp.ne.s32.totalorder %s134, %s137
      %p143 = scmp.eq.s32.totalorder %s14, 0
      %p144 = por %p142, %p143
      %p145 = scmp.ne.s32.totalorder %s134, %s137
      %p146 = scmp.eq.s32.totalorder %s19, 1
      %p147 = por %p145, %p146
      %p148 = scmp.ne.s32.totalorder %s137, %s138
      %p149 = scmp.eq.s32.totalorder %s19, 0
      %p150 = por %p148, %p149
      %p151 = scmp.ne.s32.totalorder %s137, %s138
      %p152 = scmp.eq.s32.totalorder %s20, 1
      %p153 = por %p151, %p152
      %p155 = scmp.ne.s32.totalorder %s138, %s154
      %p156 = scmp.eq.s32.totalorder %s20, 0
      %p157 = por %p155, %p156
      %p158 = scmp.le.s32.totalorder 1, %s14
      %p159 = scmp.lt.s32.totalorder %s14, 3
      %p160 = pnand %p158, %p159
      %p161 = pneg %p160
      // Predicated region
      $region9: #{simple_model_forward.1} parent=5 // pred_check
        _
      $region10: #{simple_model_forward.1} parent=5 // pred_check_branch
        %163 = sbr.rel (%p160) target = $region12
      $region11: #{simple_model_forward.1} parent=5 // pred_region
        %s164 = ssub.s32 %s14, 1
        // Predicated region
        $region13: #{simple_model_forward.1} parent=11 // pred_check
          %p165 = pneg %p61
        $region14: #{simple_model_forward.1} parent=11 // pred_check_branch
          %167 = sbr.rel (%p165) target = $region16
        $region15: #{simple_model_forward.1} parent=11 // pred_region
          _
        $region16: #{simple_model_forward.1} parent=11 // pred_fallthru
          _
        // Predicated region
        $region17: #{simple_model_forward.1} parent=11 // pred_check
          %p168 = pneg %p82
        $region18: #{simple_model_forward.1} parent=11 // pred_check_branch
          %170 = sbr.rel (%p168) target = $region20
        $region19: #{simple_model_forward.1} parent=11 // pred_region
          _
        $region20: #{simple_model_forward.1} parent=11 // pred_fallthru
          _
        // Predicated region
        $region21: #{simple_model_forward.1} parent=11 // pred_check
          %p171 = pneg %p103
        $region22: #{simple_model_forward.1} parent=11 // pred_check_branch
          %173 = sbr.rel (%p171) target = $region24
        $region23: #{simple_model_forward.1} parent=11 // pred_region
          _
        $region24: #{simple_model_forward.1} parent=11 // pred_fallthru
          _
        // Predicated region
        $region25: #{simple_model_forward.1} parent=11 // pred_check
          %p174 = pneg %p124
        $region26: #{simple_model_forward.1} parent=11 // pred_check_branch
          %176 = sbr.rel (%p174) target = $region28
        $region27: #{simple_model_forward.1} parent=11 // pred_region
          _
        $region28: #{simple_model_forward.1} parent=11 // pred_fallthru
          _
      $region12: #{simple_model_forward.1} parent=5 // pred_fallthru
        _
      %p177 = scmp.lt.s32.totalorder %s14, 2
      // Predicated region
      $region29: #{simple_model_forward.1} parent=5 // pred_check
        %p178 = pneg %p177
      $region30: #{simple_model_forward.1} parent=5 // pred_check_branch
        %180 = sbr.rel (%p178) target = $region32
      $region31: #{simple_model_forward.1} parent=5 // pred_region
        // Predicated region
        $region33: #{simple_model_forward.1} parent=31 // pred_check
          %p181 = pneg %p34
        $region34: #{simple_model_forward.1} parent=31 // pred_check_branch
          %183 = sbr.rel (%p181) target = $region36
        $region35: #{simple_model_forward.1} parent=31 // pred_region
          %p184 = scmp.lt.s32.totalorder %s14, 1
          %s185 = scalar_select %p184, %s14, 1
          %s186 = smul.addr %s185, 8
          %s187 = scalar_lea.vmem %s0, %s186
        $region36: #{simple_model_forward.1} parent=31 // pred_fallthru
          _
      $region32: #{simple_model_forward.1} parent=5 // pred_fallthru
        _
      %p188 = scmp.le.s32.totalorder 1, %s14
      %p189 = scmp.lt.s32.totalorder %s14, 3
      %p190 = pnand %p188, %p189
      %p191 = pneg %p190
      // Predicated region
      $region37: #{simple_model_forward.1} parent=5 // pred_check
        _
      $region38: #{simple_model_forward.1} parent=5 // pred_check_branch
        %193 = sbr.rel (%p190) target = $region40
      $region39: #{simple_model_forward.1} parent=5 // pred_region
        %s194 = ssub.s32 %s14, 1
        %p195 = scmp.lt.s32.totalorder %s19, 1
        %s196 = scalar_select %p195, %s19, 1
        %s197 = smul.addr %s196, 8
        %s198 = scalar_lea.vmem %s0, %s197
        %p199 = pneg %p40
        %p200 = pneg %p37
        %p201 = pneg %p61
        %p202 = pneg %p58
        %p203 = pneg %p82
        %p204 = pneg %p79
        %p205 = pneg %p103
        %p206 = pneg %p100
        %p207 = pneg %p124
        %p208 = pneg %p121
        %p209 = pneg %p150
        %p210 = pneg %p147
        %s211 = sand.u32 %s137, 1
        %s212 = scalar_lea.sflag [#allocation3], %s211
        %s213 = sand.u32 %s137, 1
        %s214 = smul.addr %s213, 8
        %s215 = scalar_lea.vmem [#allocation2], %s214
        %p216 = scmp.lt.s32.totalorder %s19, 1
        %s217 = scalar_select %p216, %s19, 1
        %s218 = smul.addr %s217, 8
        %s219 = scalar_lea.vmem %s0, %s218
        %v221 = vld [vmem:[%s219] sm:$0xff]
        %v222 = vpack.c.bf16 %v221, %v221
        %v223 = vld [vmem:[%s1] sm:$0xf]
        %v224 = vld [vmem:[%s1 + $0x4] sm:$0xf]
        %v225 = vld [vmem:[%s2] sm:$0x1]
        %v227 = vlaneseq
        %v228 = vshrl.u32 %v227, 7
        %v229 = vsub.s32 0, %v228
        %v230 = vrot.slane %v225, %v229
        %v234 = vunpack.c.l.b16 %v223
        %v235 = vunpack.c.l.b16 %v224
        %v236 = vpack.c.b16 %v235, %v234
        %vm238 = vcmask 130048
        %v240 = vsel %vm238, %v222, 0
        %242 = vmatprep.subr.bf16.mxu0 0
        %243 = vmatpush1.bf16.msra.mxu0 0
        %244 = vmatprep.subr.bf16.mxu0 0
        %245 = vmatpush1.bf16.msra.mxu0 0
        %246 = vmatprep.subr.bf16.mxu0 0
        %247 = vmatpush1.bf16.msra.mxu0 0
        %248 = vmatprep.subr.bf16.mxu0 0
        %249 = vmatpush1.bf16.msra.mxu0 0
        %250 = vmatprep.subr.bf16.mxu0 0
        %251 = vmatpush1.bf16.msra.mxu0 0
        %252 = vmatprep.subr.bf16.mxu0 0
        %253 = vmatpush1.bf16.msra.mxu0 0
        %254 = vmatprep.subr.bf16.mxu0 0
        %255 = vmatpush1.bf16.msra.mxu0 0
        %256 = vmatprep.subr.bf16.mxu0 0
        %257 = vmatpush1.bf16.msra.mxu0 %v236
        %258 = vmatprep.subr.bf16.mxu0 0
        %259 = vmatpush2.bf16.msra.mxu0 0
        %260 = vmatprep.subr.bf16.mxu0 0
        %261 = vmatpush2.bf16.msra.mxu0 0
        %262 = vmatprep.subr.bf16.mxu0 0
        %263 = vmatpush2.bf16.msra.mxu0 0
        %264 = vmatprep.subr.bf16.mxu0 0
        %265 = vmatpush2.bf16.msra.mxu0 0
        %266 = vmatprep.subr.bf16.mxu0 0
        %267 = vmatpush2.bf16.msra.mxu0 0
        %268 = vmatprep.subr.bf16.mxu0 0
        %269 = vmatpush2.bf16.msra.mxu0 0
        %270 = vmatprep.subr.bf16.mxu0 0
        %271 = vmatpush2.bf16.msra.mxu0 0
        %272 = vmatprep.subr.bf16.mxu0 0
        %273 = vmatpush2.bf16.msra.mxu0 0
        %274 = vmatprep.mubr.bf16.mxu0 0
        %275 = vmatmul.mubr.bf16.gmra.mxu0 %v240
        %v276 = vpop.f32.mrf.mxu0
        %v277 = vadd.f32 %v230, %v276
        %v278 = vpop.f32.mrf.mxu0
        %v279 = vpop.f32.mrf.mxu0
        %v280 = vpop.f32.mrf.mxu0
        %281 = vdwg.mxu0
        %v282 = vmax.f32 %v277, 0.0
        %v283 = vpack.c.bf16 %v282, %v282
        %v284 = vld [vmem:[%s3] sm:$0xf]
        %v285 = vld [vmem:[%s3 + $0x4] sm:$0xf]
        %v286 = vld [vmem:[%s3 + $0x8] sm:$0xf]
        %v287 = vld [vmem:[%s3 + $0xc] sm:$0xf]
        %v288 = vld [vmem:[%s3 + $0x10] sm:$0xf]
        %v289 = vld [vmem:[%s3 + $0x14] sm:$0xf]
        %v290 = vld [vmem:[%s3 + $0x18] sm:$0xf]
        %v291 = vld [vmem:[%s3 + $0x1c] sm:$0xf]
        %v292 = vld [vmem:[%s3 + $0x20] sm:$0xf]
        %v293 = vld [vmem:[%s3 + $0x24] sm:$0xf]
        %v294 = vld [vmem:[%s3 + $0x28] sm:$0xf]
        %v295 = vld [vmem:[%s3 + $0x2c] sm:$0xf]
        %v296 = vld [vmem:[%s3 + $0x30] sm:$0xf]
        %v297 = vld [vmem:[%s3 + $0x34] sm:$0xf]
        %v298 = vld [vmem:[%s3 + $0x38] sm:$0xf]
        %v299 = vld [vmem:[%s3 + $0x3c] sm:$0xf]
        %v300 = vld [vmem:[%s4] sm:$0x1]
        %v302 = vlaneseq
        %v303 = vshrl.u32 %v302, 7
        %v304 = vsub.s32 0, %v303
        %v305 = vrot.slane %v300, %v304
        %v323 = vunpack.c.l.b16 %v284
        %v324 = vunpack.c.l.b16 %v285
        %v325 = vunpack.c.l.b16 %v286
        %v326 = vunpack.c.l.b16 %v287
        %v327 = vunpack.c.l.b16 %v288
        %v328 = vunpack.c.l.b16 %v289
        %v329 = vunpack.c.l.b16 %v290
        %v330 = vunpack.c.l.b16 %v291
        %v331 = vunpack.c.l.b16 %v292
        %v332 = vunpack.c.l.b16 %v293
        %v333 = vunpack.c.l.b16 %v294
        %v334 = vunpack.c.l.b16 %v295
        %v335 = vunpack.c.l.b16 %v296
        %v336 = vunpack.c.l.b16 %v297
        %v337 = vunpack.c.l.b16 %v298
        %v338 = vunpack.c.l.b16 %v299
        %v339 = vpack.c.b16 %v324, %v323
        %v340 = vpack.c.b16 %v326, %v325
        %v341 = vpack.c.b16 %v328, %v327
        %v342 = vpack.c.b16 %v330, %v329
        %v343 = vpack.c.b16 %v332, %v331
        %v344 = vpack.c.b16 %v334, %v333
        %v345 = vpack.c.b16 %v336, %v335
        %v346 = vpack.c.b16 %v338, %v337
        %355 = vmatprep.subr.bf16.mxu0 0
        %356 = vmatpush1.bf16.msra.mxu0 %v346
        %357 = vmatprep.subr.bf16.mxu0 0
        %358 = vmatpush1.bf16.msra.mxu0 %v345
        %359 = vmatprep.subr.bf16.mxu0 0
        %360 = vmatpush1.bf16.msra.mxu0 %v344
        %361 = vmatprep.subr.bf16.mxu0 0
        %362 = vmatpush1.bf16.msra.mxu0 %v343
        %363 = vmatprep.subr.bf16.mxu0 0
        %364 = vmatpush1.bf16.msra.mxu0 %v342
        %365 = vmatprep.subr.bf16.mxu0 0
        %366 = vmatpush1.bf16.msra.mxu0 %v341
        %367 = vmatprep.subr.bf16.mxu0 0
        %368 = vmatpush1.bf16.msra.mxu0 %v340
        %369 = vmatprep.subr.bf16.mxu0 0
        %370 = vmatpush1.bf16.msra.mxu0 %v339
        %371 = vmatprep.subr.bf16.mxu0 0
        %372 = vmatpush2.bf16.msra.mxu0 0
        %373 = vmatprep.subr.bf16.mxu0 0
        %374 = vmatpush2.bf16.msra.mxu0 0
        %375 = vmatprep.subr.bf16.mxu0 0
        %376 = vmatpush2.bf16.msra.mxu0 0
        %377 = vmatprep.subr.bf16.mxu0 0
        %378 = vmatpush2.bf16.msra.mxu0 0
        %379 = vmatprep.subr.bf16.mxu0 0
        %380 = vmatpush2.bf16.msra.mxu0 0
        %381 = vmatprep.subr.bf16.mxu0 0
        %382 = vmatpush2.bf16.msra.mxu0 0
        %383 = vmatprep.subr.bf16.mxu0 0
        %384 = vmatpush2.bf16.msra.mxu0 0
        %385 = vmatprep.subr.bf16.mxu0 0
        %386 = vmatpush2.bf16.msra.mxu0 0
        %387 = vmatprep.mubr.bf16.mxu0 0
        %388 = vmatmul.mubr.bf16.gmra.mxu0 %v283
        %v389 = vpop.f32.mrf.mxu0
        %v390 = vadd.f32 %v305, %v389
        %v391 = vpop.f32.mrf.mxu0
        %v392 = vpop.f32.mrf.mxu0
        %v393 = vpop.f32.mrf.mxu0
        %394 = vdwg.mxu0
        %vm395 = vcmask 64512
        %396 = vst.msk [vmem:[%s215] sm:$0xff] %vm395, %v390
        %s397 = sand.u32 %s137, 1
        %s398 = scalar_lea.sflag [#allocation3], %s397
        %s399 = sand.u32 %s137, 1
        %s400 = smul.addr %s399, 8
        %s401 = scalar_lea.vmem [#allocation2], %s400
        // Predicated region
        $region41: #{simple_model_forward.1} parent=39 // pred_check
          %p402 = pneg %p147
        $region42: #{simple_model_forward.1} parent=39 // pred_check_branch
          %404 = sbr.rel (%p402) target = $region44
        $region43: #{simple_model_forward.1} parent=39 // pred_region
          %s406 = ssub.s32 128, 128
          %407 = vsyncadd %s398, %s406
          %s408 = smul.addr %s19, 128
          %s409 = scalar_lea.hbm %s5, %s408
          %s411 = sshll.u32 %s401, 4
          %s412 = int_to_ptr.vmem [resolvable:$true] %s411
          %414 = dma.vmem_to_hbm [thread:$0]  %s412, 128, %s409, %s398
        $region44: #{simple_model_forward.1} parent=39 // pred_fallthru
          _
      $region40: #{simple_model_forward.1} parent=5 // pred_fallthru
        _
      %p415 = scmp.le.s32.totalorder 2, %s14
      // Predicated region
      $region45: #{simple_model_forward.1} parent=5 // pred_check
        %p416 = pneg %p415
      $region46: #{simple_model_forward.1} parent=5 // pred_check_branch
        %418 = sbr.rel (%p416) target = $region48
      $region47: #{simple_model_forward.1} parent=5 // pred_region
        %s419 = ssub.s32 %s14, 2
        // Predicated region
        $region49: #{simple_model_forward.1} parent=47 // pred_check
          %p420 = pneg %p153
        $region50: #{simple_model_forward.1} parent=47 // pred_check_branch
          %422 = sbr.rel (%p420) target = $region52
        $region51: #{simple_model_forward.1} parent=47 // pred_region
          %s423 = sand.u32 %s138, 1
          %s424 = scalar_lea.sflag [#allocation3], %s423
          %s425 = sand.u32 %s138, 1
          %s426 = smul.addr %s425, 8
          %s427 = scalar_lea.vmem [#allocation2], %s426
          %428 = dma.done %s424, 128
        $region52: #{simple_model_forward.1} parent=47 // pred_fallthru
          _
      $region48: #{simple_model_forward.1} parent=5 // pred_fallthru
        _
    $region6: #{simple_model_forward.1} parent=1 // loop_footer
      %s18 = sadd.s32 1, %s14
    $region7: #{simple_model_forward.1} parent=1 // loop_footer_branch
      %13 = sbr.rel target = $region3
    $region8: #{simple_model_forward.1} parent=1 // loop_exit
      _
    %429 = vsyncpa [#allocation3], 1
    %s430 = scalar_lea.sflag [#allocation3], 1
    %431 = vsyncpa %s430, 1

</llo_original>
